<compile_context>
chip_gen: v7x
topology: tpu7x:2x2x1
jax: 0.10.0
libtpu: 0.0.40
codegen_flags: <defaults>
</compile_context>

<pallas_src>
import math

import jax
import jax.numpy as jnp
from jax.experimental import pallas as pl
from jax.experimental.pallas import tpu as pltpu


def _one_hot_kernel(arr_ref, mask_ref, out_ref):
    # arr_ref:  (tn, 1) int32      -- token ids for this row block
    # mask_ref: (tn, 1) out-dtype  -- mask for this row block
    # out_ref:  (tn, tv) out-dtype -- one vocab tile of the one-hot slab
    tv = out_ref.shape[1]
    v0 = pl.program_id(1) * tv                                  # vocab offset of this tile
    local_idx = arr_ref[...] - v0                               # (tn, 1), O(tn) work
    m = mask_ref[...]                                           # (tn, 1)
    lane_ids = jax.lax.broadcasted_iota(jnp.int32, out_ref.shape, 1)
    zero = jnp.zeros((), dtype=out_ref.dtype)
    out_ref[...] = jnp.where(lane_ids == local_idx, m, zero)    # broadcast m over lanes


def one_hot_encoder(array, mask, vocab_size, *, tile_n=None, tile_v=None,
                    out_dtype=jnp.float32,
                    block_budget=16 * 1024 * 1024,
                    vmem_limit_bytes=48 * 1024 * 1024):
    """array: integer array of any shape; mask: same shape (float or int).
    Returns `out_dtype` array of shape array.shape + (vocab_size,)."""
    orig_shape = tuple(array.shape)
    n = math.prod(orig_shape) if orig_shape else 1
    if n == 0:
        return jnp.zeros(orig_shape + (vocab_size,), out_dtype)

    itemsize = jnp.dtype(out_dtype).itemsize
    n8 = pl.cdiv(n, 8) * 8

    # ---- vocab tile: lane-dense (multiple of 128) and never wider than the array
    auto_v = tile_v is None
    if auto_v:
        if vocab_size < 128:
            tile_v = vocab_size                       # full-extent block (exact array dim)
        else:
            tile_v = min((vocab_size // 128) * 128, 4096)

    # ---- row tile: target ~block_budget output blocks, multiple of 8 rows
    if tile_n is None:
        tile_n = block_budget // (tile_v * itemsize)
        tile_n = max(8, min(4096, (tile_n // 8) * 8))
    tile_n = min(tile_n, n8)
    tile_n = max(8, (tile_n // 8) * 8)

    # ---- small-N / large-V: widen the vocab tile so the block stays near budget
    if auto_v and vocab_size >= 128 and tile_n * tile_v * itemsize < block_budget:
        v_lane_full = (vocab_size // 128) * 128
        tv_budget = max(128, (block_budget // (tile_n * itemsize)) // 128 * 128)
        tile_v = max(tile_v, min(v_lane_full, tv_budget))

    grid_n = pl.cdiv(n, tile_n)
    grid_v = pl.cdiv(vocab_size, tile_v)

    # Pad only the tiny (n, 1) inputs so every input block read is well-defined.
    # The output keeps its exact shape: partial row / vocab blocks are masked on
    # writeback, so NO post-kernel slice touches the one-hot slab.
    n_in = grid_n * tile_n
    arr_flat = array.reshape(n, 1).astype(jnp.int32)
    mask_flat = mask.reshape(n, 1).astype(out_dtype)
    if n_in != n:
        arr_flat = jnp.pad(arr_flat, ((0, n_in - n), (0, 0)))
        mask_flat = jnp.pad(mask_flat, ((0, n_in - n), (0, 0)))

    out = pl.pallas_call(
        _one_hot_kernel,
        out_shape=jax.ShapeDtypeStruct((n, vocab_size), out_dtype),
        grid_spec=pltpu.PrefetchScalarGridSpec(
            num_scalar_prefetch=0,
            grid=(grid_n, grid_v),                     # rows first (megacore), vocab inner
            in_specs=[
                pl.BlockSpec((tile_n, 1), lambda i, j: (i, 0)),
                pl.BlockSpec((tile_n, 1), lambda i, j: (i, 0)),
            ],
            out_specs=pl.BlockSpec((tile_n, tile_v), lambda i, j: (i, j)),
        ),
        compiler_params=pltpu.CompilerParams(
            dimension_semantics=("parallel", "parallel"),
            vmem_limit_bytes=vmem_limit_bytes,
        ),
    )(arr_flat, mask_flat)

    return out.reshape(orig_shape + (vocab_size,))


if __name__ == "__main__":
    B, S = 2, 8
    vocab_size = 128  # lane-dense fast path

    key = jax.random.PRNGKey(0)
    k1, k2 = jax.random.split(key)
    array = jax.random.randint(k1, (B, S), 0, vocab_size, dtype=jnp.int32)
    mask = (jax.random.uniform(k2, (B, S)) > 0.3).astype(jnp.float32)

    out = jax.block_until_ready(one_hot_encoder(array, mask, vocab_size))
    ref = jax.nn.one_hot(array, vocab_size, dtype=jnp.float32) * mask[..., None]
    assert out.shape == (B, S, vocab_size)
    assert out.dtype == jnp.float32
    assert jnp.allclose(out, ref), "mismatch vs reference (V=128)"

    # Non-multiple-of-128 vocab: exact-width output, masked last-lane stores.
    vs2 = 32
    array2 = jax.random.randint(k1, (B, S), 0, vs2, dtype=jnp.int32)
    out2 = jax.block_until_ready(one_hot_encoder(array2, mask, vs2))
    ref2 = jax.nn.one_hot(array2, vs2, dtype=jnp.float32) * mask[..., None]
    assert out2.shape == (B, S, vs2)
    assert jnp.allclose(out2, ref2), "mismatch vs reference (V=32)"

    # Vocab not a multiple of the tile (exercises masked partial vocab block).
    vs3 = 200
    array3 = jax.random.randint(k2, (B, S), 0, vs3, dtype=jnp.int32)
    out3 = jax.block_until_ready(one_hot_encoder(array3, mask, vs3))
    ref3 = jax.nn.one_hot(array3, vs3, dtype=jnp.float32) * mask[..., None]
    assert out3.shape == (B, S, vs3)
    assert jnp.allclose(out3, ref3), "mismatch vs reference (V=200)"

    print("KERNEL_OK")
</pallas_src>

<mosaic_0001>
module attributes {stable_mosaic.version = 11 : i64} {
  func.func @_one_hot_kernel(%arg0: i32, %arg1: i32, %arg2: memref<16x1xi32, #tpu.memory_space<vmem>>, %arg3: memref<16x1xf32, #tpu.memory_space<vmem>>, %arg4: memref<16x128xf32, #tpu.memory_space<vmem>>) attributes {dimension_semantics = [#tpu.dimension_semantics<parallel>, #tpu.dimension_semantics<parallel>], iteration_bounds = array<i64: 1, 1>, scalar_prefetch = 0 : i64, scratch_operands = 0 : i64, tpu.core_type = #tpu.core_type<tc>, window_params = [{transform_indices = @transform_0, window_bounds = array<i64: 16, 1>}, {transform_indices = @transform_1, window_bounds = array<i64: 16, 1>}, {transform_indices = @transform_2, window_bounds = array<i64: 16, 128>}]} {
    %c128_i32 = arith.constant 128 : i32
    %0 = arith.muli %arg1, %c128_i32 : i32
    %c0 = arith.constant 0 : index
    %c0_0 = arith.constant 0 : index
    %1 = vector.load %arg2[%c0, %c0_0] : memref<16x1xi32, #tpu.memory_space<vmem>>, vector<16x1xi32>
    %2 = vector.broadcast %0 : i32 to vector<16x1xi32>
    %3 = arith.subi %1, %2 : vector<16x1xi32>
    %c0_1 = arith.constant 0 : index
    %c0_2 = arith.constant 0 : index
    %4 = vector.load %arg3[%c0_1, %c0_2] : memref<16x1xf32, #tpu.memory_space<vmem>>, vector<16x1xf32>
    %5 = tpu.iota {dimensions = array<i32: 1>} : vector<16x128xi32>
    %6 = vector.broadcast %3 : vector<16x1xi32> to vector<16x128xi32>
    %7 = arith.cmpi eq, %5, %6 : vector<16x128xi32>
    %cst = arith.constant 0.000000e+00 : f32
    %8 = vector.shape_cast %4 : vector<16x1xf32> to vector<16x1xf32>
    %9 = vector.broadcast %8 : vector<16x1xf32> to vector<16x128xf32>
    %10 = vector.broadcast %cst : f32 to vector<16x128xf32>
    %11 = arith.select %7, %9, %10 : vector<16x128xi1>, vector<16x128xf32>
    %c0_3 = arith.constant 0 : index
    %c0_4 = arith.constant 0 : index
    %12 = vector.load %arg4[%c0_3, %c0_4] : memref<16x128xf32, #tpu.memory_space<vmem>>, vector<16x128xf32>
    tpu.vector_store %arg4[%c0_3, %c0_4], %11 {strides = array<i32>} : memref<16x128xf32, #tpu.memory_space<vmem>>, vector<16x128xf32>,
    return
  }
  func.func @transform_0(%arg0: i32, %arg1: i32) -> (i32, i32) {
    %c0_i32 = arith.constant 0 : i32
    %c0_i32_0 = arith.constant 0 : i32
    return %arg0, %c0_i32 : i32, i32
  }
  func.func @transform_1(%arg0: i32, %arg1: i32) -> (i32, i32) {
    %c0_i32 = arith.constant 0 : i32
    %c0_i32_0 = arith.constant 0 : i32
    return %arg0, %c0_i32 : i32, i32
  }
  func.func @transform_2(%arg0: i32, %arg1: i32) -> (i32, i32) {
    %c0_i32 = arith.constant 0 : i32
    return %arg0, %arg1 : i32, i32
  }
}

</mosaic_0001>

<llo_original>
// kernel: tpu_custom_call.1
$region0: #{tpu_custom_call.1}
  #allocation0 [shape = 'u32[]', space=smem, size = 0x4, offset = 0x4, fixed_abs, tag = 'smem constant byte address 0x4 - core index']
  #allocation1 [shape = 'u32[144,128]{1,0:T(1,128)}', space=vmem, size = 0x12000, scoped, tag = 'internal scratch']
  %s0 = inlined_call_operand.vmem [shape: s32[16,1], index: 0, kind: input, shape index: {}]
  %s1 = inlined_call_operand.vmem [shape: f32[16,1], index: 1, kind: input, shape index: {}]
  %s2 = inlined_call_operand.hbm [shape: f32[16,128], index: 2, kind: output, shape index: {}]
  %s3 = sld [smem:[#allocation0]]
  $region18: #{tpu_custom_call.1} parent=0
    _
  %s5 = ssub.s32 1, %s3
  %s6 = scalar_select 0, %s5, %s3
  $region1: #{tpu_custom_call.1} parent=0
    #allocation2 [shape = 'u8[8192]{0}', space=vmem, size = 0x2000, scoped, tag = 'output window, operand 0, single buffered']
    #allocation3 [shape = 's32[1]{0}', space=sflag, size = 0x4, scoped, tag = 'scoped memory for tpu_custom_call.1']
    %7 = vsyncpa [#allocation3], 0
    // Predicated region
    $region2: #{tpu_custom_call.1} parent=1 // pred_check
      _
    $region3: #{tpu_custom_call.1} parent=1 // pred_check_branch
      %9 = sbr.rel (0) target = $region5
    $region4: #{tpu_custom_call.1} parent=1 // pred_region
      _
    $region5: #{tpu_custom_call.1} parent=1 // pred_fallthru
      _
    // Predicated region
    $region6: #{tpu_custom_call.1} parent=1 // pred_check
      _
    $region7: #{tpu_custom_call.1} parent=1 // pred_check_branch
      %11 = sbr.rel (0) target = $region9
    $region8: #{tpu_custom_call.1} parent=1 // pred_region
      _
    $region9: #{tpu_custom_call.1} parent=1 // pred_fallthru
      _
    %s12 = smul.u32 0, 128
    %v13 = vld [vmem:[%s0] sm:$0xff]
    %v14 = vld [vmem:[%s0 + $0x8] sm:$0xff]
    %v15 = vstv %s12
    %v16 = vsub.s32 %v13, %v15
    %v17 = vsub.s32 %v14, %v15
    %v18 = vld [vmem:[%s1] sm:$0xff]
    %v19 = vld [vmem:[%s1 + $0x8] sm:$0xff]
    %v20 = vlaneseq
    %v21 = vand.u32 %v20, 127
    %22 = vset.pattern.permute.xlu0 0
    %23 = vperm.xlu0 %22, %v16
    %v24 = vpop.permute.xlu0 %23
    %25 = vset.pattern.permute.xlu0 0
    %26 = vperm.xlu0 %25, %v17
    %v27 = vpop.permute.xlu0 %26
    %vm28 = vcmp.eq.s32.totalorder %v21, %v24
    %vm29 = vcmp.eq.s32.totalorder %v21, %v27
    %31 = vset.pattern.permute.xlu0 0
    %32 = vperm.xlu0 %31, %v18
    %v33 = vpop.permute.xlu0 %32
    %36 = vset.pattern.permute.xlu0 0
    %37 = vperm.xlu0 %36, %v19
    %v38 = vpop.permute.xlu0 %37
    %v40 = vsel %vm28, %v33, 0.0
    %v41 = vsel %vm29, %v38, 0.0
    %42 = vst [vmem:[#allocation2] sm:$0xff] %v40
    %43 = vst [vmem:[#allocation2 + $0x8] sm:$0xff] %v41
    // Predicated region
    $region10: #{tpu_custom_call.1} parent=1 // pred_check
      _
    $region11: #{tpu_custom_call.1} parent=1 // pred_check_branch
      %45 = sbr.rel (0) target = $region13
    $region12: #{tpu_custom_call.1} parent=1 // pred_region
      %s47 = ssub.s32 256, 256
      %48 = vsyncadd [#allocation3], %s47
      %s49 = sshll.u32 [#allocation2], 4
      %s50 = int_to_ptr.vmem [resolvable:$true] %s49
      %55 = dma.vmem_to_hbm [thread:$0]  %s50, 256, %s2, [#allocation3], 128, 128, 8
    $region13: #{tpu_custom_call.1} parent=1 // pred_fallthru
      _
    // Predicated region
    $region14: #{tpu_custom_call.1} parent=1 // pred_check
      _
    $region15: #{tpu_custom_call.1} parent=1 // pred_check_branch
      %57 = sbr.rel (0) target = $region17
    $region16: #{tpu_custom_call.1} parent=1 // pred_region
      %58 = dma.done [#allocation3], 256
    $region17: #{tpu_custom_call.1} parent=1 // pred_fallthru
      _
    %59 = vsyncpa [#allocation3], 1

</llo_original>
